<compile_context>
chip_gen: v6e
topology: v6e:2x2x1
jax: 0.10.0
libtpu: 0.0.40
codegen_flags: <defaults>
</compile_context>

<pallas_src>
import functools

import jax
import jax.numpy as jnp
from jax.experimental import pallas as pl
from jax.experimental.pallas import tpu as pltpu

_SQRT_2_OVER_PI = 0.7978845608028654
_GELU_COEFF = 0.044715


def _round_up(x, n):
    return ((x + n - 1) // n) * n


def _gelu_tanh(h):
    # tanh-GELU (BERT reference GELU).  tanh goes to the EUP slot; the
    # polynomial is restructured as c*h*(1 + 0.044715*h^2) to save one VALU
    # multiply and one live (tm, tf) f32 temporary.
    inner = (_SQRT_2_OVER_PI * h) * (1.0 + _GELU_COEFF * (h * h))
    return 0.5 * h * (1.0 + jnp.tanh(inner))


def _ffn_kernel_resident(x_ref, w1_ref, b1_ref, w2_ref, b2_ref, o_ref):
    # Single grid axis over token tiles; W1/W2 fully VMEM-resident
    # (single-buffered -- same block every step).
    x = x_ref[...].astype(w1_ref.dtype)
    h = jnp.dot(x, w1_ref[...], preferred_element_type=jnp.float32)
    h = h + b1_ref[...].astype(jnp.float32)
    g = _gelu_tanh(h)
    out = jnp.dot(g.astype(w2_ref.dtype), w2_ref[...],
                  preferred_element_type=jnp.float32)
    out = out + b2_ref[...].astype(jnp.float32)
    o_ref[...] = out.astype(o_ref.dtype)
    # TODO(synk): training-mode dropout would need pltpu.prng_seed /
    # pltpu.prng_random_bits; eval-mode dropout is identity, so nothing here.


def _ffn_kernel_ksplit(x_ref, w1_ref, b1_ref, w2_ref, b2_ref, o_ref, acc_ref):
    # Grid: (token tiles, d_ff tiles).  GELU is elementwise over d_ff, so the
    # hidden activation never needs full width; each k step contributes
    # GELU(x @ W1_k + b1_k) @ W2_k into a (tm, d_model) f32 accumulator.
    k = pl.program_id(1)

    @pl.when(k == 0)
    def _():
        acc_ref[...] = jnp.zeros_like(acc_ref)

    x = x_ref[...].astype(w1_ref.dtype)
    h = jnp.dot(x, w1_ref[...], preferred_element_type=jnp.float32)
    h = h + b1_ref[...].astype(jnp.float32)
    g = _gelu_tanh(h)
    acc_ref[...] += jnp.dot(g.astype(w2_ref.dtype), w2_ref[...],
                            preferred_element_type=jnp.float32)

    @pl.when(k == pl.num_programs(1) - 1)
    def _():
        o_ref[...] = (acc_ref[...] + b2_ref[...].astype(jnp.float32)
                      ).astype(o_ref.dtype)


def prepare_ffn_params(w1, b1, w2, b2, mxu_dtype=jnp.bfloat16):
    """Pad to lane-dense 128-multiples and cast matmul operands to the
    MXU-native dtype ONCE (not per forward call).
    w1: (d_model, d_ff) pre-transposed for x @ W; b1: (d_ff,);
    w2: (d_ff, d_model); b2: (d_model,)."""
    d_model, d_ff = w1.shape
    dmp = _round_up(d_model, 128)
    dfp = _round_up(d_ff, 128)
    # Zero padding is exact: GELU(0) = 0 and padded rows/cols contribute 0.
    w1p = jnp.pad(w1, ((0, dmp - d_model), (0, dfp - d_ff))).astype(mxu_dtype)
    w2p = jnp.pad(w2, ((0, dfp - d_ff), (0, dmp - d_model))).astype(mxu_dtype)
    b1p = jnp.pad(b1, (0, dfp - d_ff)).reshape(1, dfp).astype(jnp.float32)
    b2p = jnp.pad(b2, (0, dmp - d_model)).reshape(1, dmp).astype(jnp.float32)
    # TODO(synk): optional fp8 weight quantization (per-channel scales) for
    # v7x would halve resident-weight VMEM at full MXU rate.
    return w1p, b1p, w2p, b2p


def _vmem_capacity_bytes():
    try:
        return int(pltpu.get_tpu_info().vmem_capacity_bytes)
    except Exception:
        return 128 * 1024 * 1024


def _choose_dff_tile(tm, dmp, dfp, w_item, x_item, out_item, budget):
    """Largest d_ff tile (multiple of 128, exact divisor of dfp -- the d_ff
    axis is a reduction, so ragged lanes would pollute the accumulator) whose
    working set fits the VMEM budget."""
    n = dfp // 128
    cands = sorted({128 * d for d in range(1, n + 1) if n % d == 0},
                   reverse=True)
    need = 0
    for tf in cands:
        kf = dfp // tf
        nb_w = 1 if kf == 1 else 2                        # resident vs 2-buf
        need = (2 * tm * dmp * (x_item + out_item)        # x/out double-buffer
                + nb_w * 2 * dmp * tf * w_item            # W1/W2 tiles
                + nb_w * 8 * tf * 4 + 8 * dmp * 4         # b1/b2 (sublane-pad)
                + (0 if kf == 1 else tm * dmp * 4)        # f32 accumulator
                + 2 * tm * tf * 4)                        # h/g intermediates
        if need <= budget:
            return tf, kf, need
    return cands[-1], dfp // cands[-1], need


@functools.partial(jax.jit, static_argnames=("tm", "force_dff_tile"))
def positionwise_feed_forward(x, w1p, b1p, w2p, b2p, *, tm=512,
                              force_dff_tile=None):
    """x: (batch, seq, d_model); w1p/b1p/w2p/b2p from prepare_ffn_params."""
    batch, seq, d_model = x.shape
    dmp, dfp = w1p.shape
    m = batch * seq
    x_item = jnp.dtype(x.dtype).itemsize
    w_item = jnp.dtype(w1p.dtype).itemsize

    # Token tile rounded to the packed-sublane multiple of the input dtype
    # (8 for f32, 16 for bf16, 32 for int8/fp8).
    sub = max(8, 32 // x_item)
    tm_eff = min(tm, _round_up(m, sub))
    nm = pl.cdiv(m, tm_eff)  # ragged last block: rows independent, OOB masked.

    # Pad d_model lanes only if needed (no-op for BERT's 768/1024).
    x2d = x.reshape(m, d_model)
    if dmp != d_model:
        x2d = jnp.pad(x2d, ((0, 0), (0, dmp - d_model)))

    # Generation-aware VMEM budget (v5e/v6e: 128 MiB, v7x: 64 MiB/TC);
    # keep headroom for Mosaic internal scratch -- no blanket 2x hedge.
    capacity = _vmem_capacity_bytes()
    budget = int(0.85 * capacity) - (4 << 20)
    tf, kf, vmem_needed = _choose_dff_tile(
        tm_eff, dmp, dfp, w_item, x_item, x_item, budget)
    if force_dff_tile is not None:
        tf = force_dff_tile
        kf = dfp // tf
    vmem_limit = int(min(max(vmem_needed + (4 << 20), 32 << 20),
                         int(0.875 * capacity)))

    cost = pl.CostEstimate(
        flops=4 * m * dmp * dfp,          # two matmuls, 2*M*K*N each
        transcendentals=m * dfp,          # one tanh per hidden element
        bytes_accessed=(x2d.size * x_item + m * dmp * x_item
                        + (w1p.size + w2p.size) * w_item
                        + (b1p.size + b2p.size) * 4))

    if kf == 1:
        resident = pl.Buffered(1)   # constant blocks -> single-buffer weights
        grid = (nm,)
        in_specs = [
            pl.BlockSpec((tm_eff, dmp), lambda i: (i, 0)),
            pl.BlockSpec((dmp, dfp), lambda i: (0, 0), pipeline_mode=resident),
            pl.BlockSpec((1, dfp), lambda i: (0, 0), pipeline_mode=resident),
            pl.BlockSpec((dfp, dmp), lambda i: (0, 0), pipeline_mode=resident),
            pl.BlockSpec((1, dmp), lambda i: (0, 0), pipeline_mode=resident),
        ]
        out_specs = pl.BlockSpec((tm_eff, dmp), lambda i: (i, 0))
        kernel = _ffn_kernel_resident
        scratch_shapes = []
        dims = ("parallel",)
    else:
        grid = (nm, kf)                   # reduction axis last
        in_specs = [
            pl.BlockSpec((tm_eff, dmp), lambda i, k: (i, 0)),
            pl.BlockSpec((dmp, tf), lambda i, k: (0, k)),
            pl.BlockSpec((1, tf), lambda i, k: (0, k)),
            pl.BlockSpec((tf, dmp), lambda i, k: (k, 0)),
            pl.BlockSpec((1, dmp), lambda i, k: (0, 0),
                         pipeline_mode=pl.Buffered(1)),
        ]
        out_specs = pl.BlockSpec((tm_eff, dmp), lambda i, k: (i, 0))
        kernel = _ffn_kernel_ksplit
        scratch_shapes = [pltpu.VMEM((tm_eff, dmp), jnp.float32)]
        dims = ("parallel", "arbitrary")

    out2d = pl.pallas_call(
        kernel,
        out_shape=jax.ShapeDtypeStruct((m, dmp), x.dtype),
        grid_spec=pltpu.PrefetchScalarGridSpec(
            num_scalar_prefetch=0,
            grid=grid,
            in_specs=in_specs,
            out_specs=out_specs,
            scratch_shapes=scratch_shapes),
        compiler_params=pltpu.CompilerParams(
            dimension_semantics=dims,
            vmem_limit_bytes=vmem_limit),
        cost_estimate=cost,
    )(x2d, w1p, b1p, w2p, b2p)

    if dmp != d_model:
        out2d = out2d[:, :d_model]
    return out2d.reshape(batch, seq, d_model)


def _reference(x, w1, b1, w2, b2):
    h = jnp.einsum("bsd,df->bsf", x, w1) + b1
    c = _SQRT_2_OVER_PI
    g = 0.5 * h * (1.0 + jnp.tanh(c * (h + _GELU_COEFF * h ** 3)))
    return jnp.einsum("bsf,fd->bsd", g, w2) + b2


if __name__ == "__main__":
    # Small deterministic problem: batch=2, seq=8, d_model=32, d_ff=256
    batch, seq, d_model, d_ff = 2, 8, 32, 256
    key = jax.random.PRNGKey(0)
    kx, k1, kb1, k2, kb2 = jax.random.split(key, 5)

    x = jax.random.normal(kx, (batch, seq, d_model), dtype=jnp.float32)
    # Shapes match nn.Linear(d_model, d_ff) / nn.Linear(d_ff, d_model),
    # stored pre-transposed for x @ W.
    w1 = jax.random.normal(k1, (d_model, d_ff), dtype=jnp.float32) * 0.05
    b1 = jax.random.normal(kb1, (d_ff,), dtype=jnp.float32) * 0.05
    w2 = jax.random.normal(k2, (d_ff, d_model), dtype=jnp.float32) * 0.05
    b2 = jax.random.normal(kb2, (d_model,), dtype=jnp.float32) * 0.05

    ref = _reference(x, w1, b1, w2, b2)

    # 1) f32 MXU path, resident weights: exact check.
    p32 = prepare_ffn_params(w1, b1, w2, b2, mxu_dtype=jnp.float32)
    out32 = jax.block_until_ready(positionwise_feed_forward(x, *p32))
    assert out32.shape == (batch, seq, d_model)
    assert jnp.allclose(out32, ref, atol=1e-5, rtol=1e-5), "f32 path mismatch"

    # 2) f32 MXU path with a forced d_ff split (exercise the accumulator
    #    kernel used on v7x / BERT-large+): still exact.
    outks = jax.block_until_ready(
        positionwise_feed_forward(x, *p32, force_dff_tile=128))
    assert jnp.allclose(outks, ref, atol=1e-5, rtol=1e-5), "k-split mismatch"

    # 3) Default production path: bf16 operands on the MXU, f32 accumulation.
    pbf = prepare_ffn_params(w1, b1, w2, b2)  # mxu_dtype=bf16
    outbf = jax.block_until_ready(positionwise_feed_forward(x, *pbf))
    assert jnp.allclose(outbf, ref, atol=3e-2, rtol=3e-2), "bf16 path mismatch"

    print("KERNEL_OK")
</pallas_src>

<mosaic_0001>
module attributes {stable_mosaic.version = 11 : i64} {
  func.func @_ffn_kernel_resident(%arg0: i32, %arg1: memref<16x128xf32, #tpu.memory_space<vmem>>, %arg2: memref<128x256xf32, #tpu.memory_space<vmem>>, %arg3: memref<1x256xf32, #tpu.memory_space<vmem>>, %arg4: memref<256x128xf32, #tpu.memory_space<vmem>>, %arg5: memref<1x128xf32, #tpu.memory_space<vmem>>, %arg6: memref<16x128xf32, #tpu.memory_space<vmem>>) attributes {dimension_semantics = [#tpu.dimension_semantics<parallel>], iteration_bounds = array<i64: 1>, scalar_prefetch = 0 : i64, scratch_operands = 0 : i64, tpu.core_type = #tpu.core_type<tc>, window_params = [{transform_indices = @transform_0, window_bounds = array<i64: 16, 128>}, {pipeline_mode = #tpu.pipeline_mode<synchronous>, transform_indices = @transform_1, window_bounds = array<i64: 128, 256>}, {pipeline_mode = #tpu.pipeline_mode<synchronous>, transform_indices = @transform_2, window_bounds = array<i64: 1, 256>}, {pipeline_mode = #tpu.pipeline_mode<synchronous>, transform_indices = @transform_3, window_bounds = array<i64: 256, 128>}, {pipeline_mode = #tpu.pipeline_mode<synchronous>, transform_indices = @transform_4, window_bounds = array<i64: 1, 128>}, {transform_indices = @transform_5, window_bounds = array<i64: 16, 128>}]} {
    %c0 = arith.constant 0 : index
    %c0_0 = arith.constant 0 : index
    %0 = vector.load %arg1[%c0, %c0_0] : memref<16x128xf32, #tpu.memory_space<vmem>>, vector<16x128xf32>
    %c0_1 = arith.constant 0 : index
    %c0_2 = arith.constant 0 : index
    %1 = vector.load %arg2[%c0_1, %c0_2] : memref<128x256xf32, #tpu.memory_space<vmem>>, vector<128x256xf32>
    %cst = arith.constant dense<0.000000e+00> : vector<16x256xf32>
    %2 = tpu.matmul %0, %1, %cst {dimension_numbers = #tpu.dot_dimension_numbers<[1], [0], [0], [1], [0, 0, 1, 1], [], []>} : vector<16x128xf32>, vector<128x256xf32>, vector<16x256xf32> -> vector<16x256xf32>
    %c0_3 = arith.constant 0 : index
    %c0_4 = arith.constant 0 : index
    %3 = vector.load %arg3[%c0_3, %c0_4] : memref<1x256xf32, #tpu.memory_space<vmem>>, vector<1x256xf32>
    %4 = vector.broadcast %3 : vector<1x256xf32> to vector<16x256xf32>
    %5 = arith.addf %2, %4 : vector<16x256xf32>
    %cst_5 = arith.constant 0.797884583 : f32
    %6 = vector.broadcast %cst_5 : f32 to vector<16x256xf32>
    %7 = arith.mulf %6, %5 : vector<16x256xf32>
    %8 = arith.mulf %5, %5 : vector<16x256xf32>
    %cst_6 = arith.constant 4.471500e-02 : f32
    %9 = vector.broadcast %cst_6 : f32 to vector<16x256xf32>
    %10 = arith.mulf %9, %8 : vector<16x256xf32>
    %cst_7 = arith.constant 1.000000e+00 : f32
    %11 = vector.broadcast %cst_7 : f32 to vector<16x256xf32>
    %12 = arith.addf %11, %10 : vector<16x256xf32>
    %13 = arith.mulf %7, %12 : vector<16x256xf32>
    %cst_8 = arith.constant 5.000000e-01 : f32
    %14 = vector.broadcast %cst_8 : f32 to vector<16x256xf32>
    %15 = arith.mulf %14, %5 : vector<16x256xf32>
    %16 = math.tanh %13 : vector<16x256xf32>
    %cst_9 = arith.constant 1.000000e+00 : f32
    %17 = vector.broadcast %cst_9 : f32 to vector<16x256xf32>
    %18 = arith.addf %17, %16 : vector<16x256xf32>
    %19 = arith.mulf %15, %18 : vector<16x256xf32>
    %c0_10 = arith.constant 0 : index
    %c0_11 = arith.constant 0 : index
    %20 = vector.load %arg4[%c0_10, %c0_11] : memref<256x128xf32, #tpu.memory_space<vmem>>, vector<256x128xf32>
    %cst_12 = arith.constant dense<0.000000e+00> : vector<16x128xf32>
    %21 = tpu.matmul %19, %20, %cst_12 {dimension_numbers = #tpu.dot_dimension_numbers<[1], [0], [0], [1], [0, 0, 1, 1], [], []>} : vector<16x256xf32>, vector<256x128xf32>, vector<16x128xf32> -> vector<16x128xf32>
    %c0_13 = arith.constant 0 : index
    %c0_14 = arith.constant 0 : index
    %22 = vector.load %arg5[%c0_13, %c0_14] : memref<1x128xf32, #tpu.memory_space<vmem>>, vector<1x128xf32>
    %23 = vector.broadcast %22 : vector<1x128xf32> to vector<16x128xf32>
    %24 = arith.addf %21, %23 : vector<16x128xf32>
    %c0_15 = arith.constant 0 : index
    %c0_16 = arith.constant 0 : index
    %25 = vector.load %arg6[%c0_15, %c0_16] : memref<16x128xf32, #tpu.memory_space<vmem>>, vector<16x128xf32>
    tpu.vector_store %arg6[%c0_15, %c0_16], %24 {strides = array<i32>} : memref<16x128xf32, #tpu.memory_space<vmem>>, vector<16x128xf32>,
    return
  }
  func.func @transform_0(%arg0: i32) -> (i32, i32) {
    %c0_i32 = arith.constant 0 : i32
    %c0_i32_0 = arith.constant 0 : i32
    return %arg0, %c0_i32 : i32, i32
  }
  func.func @transform_1(%arg0: i32) -> (i32, i32) {
    %c0_i32 = arith.constant 0 : i32
    %c0_i32_0 = arith.constant 0 : i32
    %c0_i32_1 = arith.constant 0 : i32
    return %c0_i32, %c0_i32_0 : i32, i32
  }
  func.func @transform_2(%arg0: i32) -> (i32, i32) {
    %c0_i32 = arith.constant 0 : i32
    %c0_i32_0 = arith.constant 0 : i32
    %c0_i32_1 = arith.constant 0 : i32
    return %c0_i32, %c0_i32_0 : i32, i32
  }
  func.func @transform_3(%arg0: i32) -> (i32, i32) {
    %c0_i32 = arith.constant 0 : i32
    %c0_i32_0 = arith.constant 0 : i32
    %c0_i32_1 = arith.constant 0 : i32
    return %c0_i32, %c0_i32_0 : i32, i32
  }
  func.func @transform_4(%arg0: i32) -> (i32, i32) {
    %c0_i32 = arith.constant 0 : i32
    %c0_i32_0 = arith.constant 0 : i32
    %c0_i32_1 = arith.constant 0 : i32
    return %c0_i32, %c0_i32_0 : i32, i32
  }
  func.func @transform_5(%arg0: i32) -> (i32, i32) {
    %c0_i32 = arith.constant 0 : i32
    %c0_i32_0 = arith.constant 0 : i32
    return %arg0, %c0_i32 : i32, i32
  }
}

</mosaic_0001>

<llo_original>
// kernel: positionwise_feed_forward.1
$region0: #{positionwise_feed_forward.1}
  #allocation0 [shape = 'u32[]', space=smem, size = 0x4, offset = 0x4, fixed_abs, tag = 'smem constant byte address 0x4 - core index']
  #allocation1 [shape = 'u32[144,128]{1,0:T(1,128)}', space=vmem, size = 0x12000, scoped, tag = 'internal scratch']
  %s0 = inlined_call_operand.vmem [shape: f32[16,128], index: 0, kind: input, shape index: {}]
  %s1 = inlined_call_operand.hbm [shape: f32[128,256], index: 1, kind: input, shape index: {}]
  %s2 = inlined_call_operand.vmem [shape: f32[1,256], index: 2, kind: input, shape index: {}]
  %s3 = inlined_call_operand.hbm [shape: f32[256,128], index: 3, kind: input, shape index: {}]
  %s4 = inlined_call_operand.vmem [shape: f32[1,128], index: 4, kind: input, shape index: {}]
  %s5 = inlined_call_operand.vmem [shape: f32[16,128], index: 5, kind: output, shape index: {}]
  %s6 = sld [smem:[#allocation0]]
  $region38: #{positionwise_feed_forward.1} parent=0
    _
  %s8 = ssub.s32 1, %s6
  %s9 = scalar_select 0, %s8, %s6
  $region1: #{positionwise_feed_forward.1} parent=0
    #allocation2 [shape = 'u8[131072]{0}', space=vmem, size = 0x20000, scoped, tag = 'input window, operand 1, single buffered']
    #allocation3 [shape = 's32[1]{0}', space=sflag, size = 0x4, scoped, tag = 'scoped memory for positionwise_feed_forward.1']
    #allocation4 [shape = 'u8[131072]{0}', space=vmem, size = 0x20000, scoped, tag = 'input window, operand 3, single buffered']
    #allocation5 [shape = 's32[1]{0}', space=sflag, size = 0x4, scoped, tag = 'scoped memory for positionwise_feed_forward.1']
    %10 = vsyncpa [#allocation3], 0
    %11 = vsyncpa [#allocation5], 0
    // Predicated region
    $region2: #{positionwise_feed_forward.1} parent=1 // pred_check
      _
    $region3: #{positionwise_feed_forward.1} parent=1 // pred_check_branch
      %13 = sbr.rel (0) target = $region5
    $region4: #{positionwise_feed_forward.1} parent=1 // pred_region
      _
    $region5: #{positionwise_feed_forward.1} parent=1 // pred_fallthru
      _
    // Predicated region
    $region6: #{positionwise_feed_forward.1} parent=1 // pred_check
      _
    $region7: #{positionwise_feed_forward.1} parent=1 // pred_check_branch
      %15 = sbr.rel (0) target = $region9
    $region8: #{positionwise_feed_forward.1} parent=1 // pred_region
      %s17 = ssub.s32 4096, 4096
      %18 = vsyncadd [#allocation3], %s17
      %s19 = sshll.u32 [#allocation2], 4
      %s20 = int_to_ptr.vmem [resolvable:$true] %s19
      %25 = dma.hbm_to_vmem [thread:$0]  %s1, 4096, %s20, [#allocation3], 256, 256, 16
    $region9: #{positionwise_feed_forward.1} parent=1 // pred_fallthru
      _
    // Predicated region
    $region10: #{positionwise_feed_forward.1} parent=1 // pred_check
      _
    $region11: #{positionwise_feed_forward.1} parent=1 // pred_check_branch
      %27 = sbr.rel (0) target = $region13
    $region12: #{positionwise_feed_forward.1} parent=1 // pred_region
      _
    $region13: #{positionwise_feed_forward.1} parent=1 // pred_fallthru
      _
    // Predicated region
    $region14: #{positionwise_feed_forward.1} parent=1 // pred_check
      _
    $region15: #{positionwise_feed_forward.1} parent=1 // pred_check_branch
      %29 = sbr.rel (0) target = $region17
    $region16: #{positionwise_feed_forward.1} parent=1 // pred_region
      %s31 = ssub.s32 4096, 4096
      %32 = vsyncadd [#allocation5], %s31
      %s33 = sshll.u32 [#allocation4], 4
      %s34 = int_to_ptr.vmem [resolvable:$true] %s33
      %39 = dma.hbm_to_vmem [thread:$0]  %s3, 4096, %s34, [#allocation5], 128, 128, 8
    $region17: #{positionwise_feed_forward.1} parent=1 // pred_fallthru
      _
    // Predicated region
    $region18: #{positionwise_feed_forward.1} parent=1 // pred_check
      _
    $region19: #{positionwise_feed_forward.1} parent=1 // pred_check_branch
      %41 = sbr.rel (0) target = $region21
    $region20: #{positionwise_feed_forward.1} parent=1 // pred_region
      _
    $region21: #{positionwise_feed_forward.1} parent=1 // pred_fallthru
      _
    // Predicated region
    $region22: #{positionwise_feed_forward.1} parent=1 // pred_check
      _
    $region23: #{positionwise_feed_forward.1} parent=1 // pred_check_branch
      %43 = sbr.rel (0) target = $region25
    $region24: #{positionwise_feed_forward.1} parent=1 // pred_region
      %44 = dma.done [#allocation3], 4096
    $region25: #{positionwise_feed_forward.1} parent=1 // pred_fallthru
      _
    // Predicated region
    $region26: #{positionwise_feed_forward.1} parent=1 // pred_check
      _
    $region27: #{positionwise_feed_forward.1} parent=1 // pred_check_branch
      %46 = sbr.rel (0) target = $region29
    $region28: #{positionwise_feed_forward.1} parent=1 // pred_region
      %47 = dma.done [#allocation5], 4096
    $region29: #{positionwise_feed_forward.1} parent=1 // pred_fallthru
      _
    %v48 = vld [vmem:[%s0] sm:$0xff]
    %v49 = vld [vmem:[%s0 + $0x8] sm:$0xff]
    %v50 = vld [vmem:[#allocation2] sm:$0xff]
    %v51 = vld [vmem:[#allocation2 + $0x8] sm:$0xff]
    %v52 = vld [vmem:[#allocation2 + $0x10] sm:$0xff]
    %v53 = vld [vmem:[#allocation2 + $0x18] sm:$0xff]
    %v54 = vld [vmem:[#allocation2 + $0x20] sm:$0xff]
    %v55 = vld [vmem:[#allocation2 + $0x28] sm:$0xff]
    %v56 = vld [vmem:[#allocation2 + $0x30] sm:$0xff]
    %v57 = vld [vmem:[#allocation2 + $0x38] sm:$0xff]
    %v58 = vld [vmem:[#allocation2 + $0x40] sm:$0xff]
    %v59 = vld [vmem:[#allocation2 + $0x48] sm:$0xff]
    %v60 = vld [vmem:[#allocation2 + $0x50] sm:$0xff]
    %v61 = vld [vmem:[#allocation2 + $0x58] sm:$0xff]
    %v62 = vld [vmem:[#allocation2 + $0x60] sm:$0xff]
    %v63 = vld [vmem:[#allocation2 + $0x68] sm:$0xff]
    %v64 = vld [vmem:[#allocation2 + $0x70] sm:$0xff]
    %v65 = vld [vmem:[#allocation2 + $0x78] sm:$0xff]
    %v66 = vld [vmem:[#allocation2 + $0x80] sm:$0xff]
    %v67 = vld [vmem:[#allocation2 + $0x88] sm:$0xff]
    %v68 = vld [vmem:[#allocation2 + $0x90] sm:$0xff]
    %v69 = vld [vmem:[#allocation2 + $0x98] sm:$0xff]
    %v70 = vld [vmem:[#allocation2 + $0xa0] sm:$0xff]
    %v71 = vld [vmem:[#allocation2 + $0xa8] sm:$0xff]
    %v72 = vld [vmem:[#allocation2 + $0xb0] sm:$0xff]
    %v73 = vld [vmem:[#allocation2 + $0xb8] sm:$0xff]
    %v74 = vld [vmem:[#allocation2 + $0xc0] sm:$0xff]
    %v75 = vld [vmem:[#allocation2 + $0xc8] sm:$0xff]
    %v76 = vld [vmem:[#allocation2 + $0xd0] sm:$0xff]
    %v77 = vld [vmem:[#allocation2 + $0xd8] sm:$0xff]
    %v78 = vld [vmem:[#allocation2 + $0xe0] sm:$0xff]
    %v79 = vld [vmem:[#allocation2 + $0xe8] sm:$0xff]
    %v80 = vld [vmem:[#allocation2 + $0xf0] sm:$0xff]
    %v81 = vld [vmem:[#allocation2 + $0xf8] sm:$0xff]
    %v82 = vld [vmem:[%s2] sm:$0x3]
    %v84 = vlaneseq
    %v85 = vshrl.u32 %v84, 7
    %v86 = vsub.s32 0, %v85
    %v87 = vrot.slane %v82, %v86
    %v88 = vlaneseq
    %v89 = vshrl.u32 %v88, 7
    %v90 = vsub.s32 1, %v89
    %v91 = vrot.slane %v82, %v90
    %94 = vmatprep.subr.mxu0 %v81
    %95 = vmatpush1.msra.mxu0 %v80
    %96 = vmatprep.subr.mxu0 %v79
    %97 = vmatpush1.msra.mxu0 %v78
    %98 = vmatprep.subr.mxu0 %v77
    %99 = vmatpush1.msra.mxu0 %v76
    %100 = vmatprep.subr.mxu0 %v75
    %101 = vmatpush1.msra.mxu0 %v74
    %102 = vmatprep.subr.mxu0 %v73
    %103 = vmatpush1.msra.mxu0 %v72
    %104 = vmatprep.subr.mxu0 %v71
    %105 = vmatpush1.msra.mxu0 %v70
    %106 = vmatprep.subr.mxu0 %v69
    %107 = vmatpush1.msra.mxu0 %v68
    %108 = vmatprep.subr.mxu0 %v67
    %109 = vmatpush1.msra.mxu0 %v66
    %110 = vmatprep.subr.mxu0 %v65
    %111 = vmatpush1.msra.mxu0 %v64
    %112 = vmatprep.subr.mxu0 %v63
    %113 = vmatpush1.msra.mxu0 %v62
    %114 = vmatprep.subr.mxu0 %v61
    %115 = vmatpush1.msra.mxu0 %v60
    %116 = vmatprep.subr.mxu0 %v59
    %117 = vmatpush1.msra.mxu0 %v58
    %118 = vmatprep.subr.mxu0 %v57
    %119 = vmatpush1.msra.mxu0 %v56
    %120 = vmatprep.subr.mxu0 %v55
    %121 = vmatpush1.msra.mxu0 %v54
    %122 = vmatprep.subr.mxu0 %v53
    %123 = vmatpush1.msra.mxu0 %v52
    %124 = vmatprep.subr.mxu0 %v51
    %125 = vmatpush1.msra.mxu0 %v50
    %126 = vmatprep.subr.mxu0 0.0
    %127 = vmatpush2.msra.mxu0 0.0
    %128 = vmatprep.subr.mxu0 0.0
    %129 = vmatpush2.msra.mxu0 0.0
    %130 = vmatprep.subr.mxu0 0.0
    %131 = vmatpush2.msra.mxu0 0.0
    %132 = vmatprep.subr.mxu0 0.0
    %133 = vmatpush2.msra.mxu0 0.0
    %134 = vmatprep.subr.mxu0 0.0
    %135 = vmatpush2.msra.mxu0 0.0
    %136 = vmatprep.subr.mxu0 0.0
    %137 = vmatpush2.msra.mxu0 0.0
    %138 = vmatprep.subr.mxu0 0.0
    %139 = vmatpush2.msra.mxu0 0.0
    %140 = vmatprep.subr.mxu0 0.0
    %141 = vmatpush2.msra.mxu0 0.0
    %142 = vmatprep.subr.mxu0 0.0
    %143 = vmatpush2.msra.mxu0 0.0
    %144 = vmatprep.subr.mxu0 0.0
    %145 = vmatpush2.msra.mxu0 0.0
    %146 = vmatprep.subr.mxu0 0.0
    %147 = vmatpush2.msra.mxu0 0.0
    %148 = vmatprep.subr.mxu0 0.0
    %149 = vmatpush2.msra.mxu0 0.0
    %150 = vmatprep.subr.mxu0 0.0
    %151 = vmatpush2.msra.mxu0 0.0
    %152 = vmatprep.subr.mxu0 0.0
    %153 = vmatpush2.msra.mxu0 0.0
    %154 = vmatprep.subr.mxu0 0.0
    %155 = vmatpush2.msra.mxu0 0.0
    %156 = vmatprep.subr.mxu0 0.0
    %157 = vmatpush2.msra.mxu0 0.0
    %158 = vmatprep.mubr.f32.mxu0 0.0
    %159 = vmatmul.mubr.f32.gmra.mxu0 %v48
    %v160 = vpop.f32.mrf.mxu0
    %v161 = vadd.f32 %v87, %v160
    %v162 = vpop.f32.mrf.mxu0
    %v163 = vadd.f32 %v91, %v162
    %164 = vmatprep.mubr.f32.mxu0 0.0
    %165 = vmatmul.mubr.f32.gmra.mxu0 %v49
    %v166 = vpop.f32.mrf.mxu0
    %v167 = vadd.f32 %v87, %v166
    %v168 = vpop.f32.mrf.mxu0
    %v169 = vadd.f32 %v91, %v168
    %170 = vdwg.mxu0
    %v171 = vmul.f32 %v161, 0.7978846
    %v172 = vmul.f32 %v163, 0.7978846
    %v173 = vmul.f32 %v167, 0.7978846
    %v174 = vmul.f32 %v169, 0.7978846
    %v175 = vmul.f32 %v161, %v161
    %v176 = vmul.f32 %v163, %v163
    %v177 = vmul.f32 %v167, %v167
    %v178 = vmul.f32 %v169, %v169
    %v179 = vmul.f32 %v175, 0.044715
    %v180 = vmul.f32 %v176, 0.044715
    %v181 = vmul.f32 %v177, 0.044715
    %v182 = vmul.f32 %v178, 0.044715
    %v183 = vadd.f32 %v179, 1.0
    %v184 = vadd.f32 %v180, 1.0
    %v185 = vadd.f32 %v181, 1.0
    %v186 = vadd.f32 %v182, 1.0
    %v187 = vmul.f32 %v171, %v183
    %v188 = vmul.f32 %v172, %v184
    %v189 = vmul.f32 %v173, %v185
    %v190 = vmul.f32 %v174, %v186
    %v191 = vmul.f32 %v161, 0.5
    %v192 = vmul.f32 %v163, 0.5
    %v193 = vmul.f32 %v167, 0.5
    %v194 = vmul.f32 %v169, 0.5
    %v195 = vtanh.pop %v187
    %v196 = vtanh.pop %v188
    %v197 = vtanh.pop %v189
    %v198 = vtanh.pop %v190
    %v199 = vadd.f32 %v195, 1.0
    %v200 = vadd.f32 %v196, 1.0
    %v201 = vadd.f32 %v197, 1.0
    %v202 = vadd.f32 %v198, 1.0
    %v203 = vmul.f32 %v191, %v199
    %v204 = vmul.f32 %v192, %v200
    %v205 = vmul.f32 %v193, %v201
    %v206 = vmul.f32 %v194, %v202
    %v207 = vld [vmem:[#allocation4] sm:$0xff]
    %v208 = vld [vmem:[#allocation4 + $0x8] sm:$0xff]
    %v209 = vld [vmem:[#allocation4 + $0x10] sm:$0xff]
    %v210 = vld [vmem:[#allocation4 + $0x18] sm:$0xff]
    %v211 = vld [vmem:[#allocation4 + $0x20] sm:$0xff]
    %v212 = vld [vmem:[#allocation4 + $0x28] sm:$0xff]
    %v213 = vld [vmem:[#allocation4 + $0x30] sm:$0xff]
    %v214 = vld [vmem:[#allocation4 + $0x38] sm:$0xff]
    %v215 = vld [vmem:[#allocation4 + $0x40] sm:$0xff]
    %v216 = vld [vmem:[#allocation4 + $0x48] sm:$0xff]
    %v217 = vld [vmem:[#allocation4 + $0x50] sm:$0xff]
    %v218 = vld [vmem:[#allocation4 + $0x58] sm:$0xff]
    %v219 = vld [vmem:[#allocation4 + $0x60] sm:$0xff]
    %v220 = vld [vmem:[#allocation4 + $0x68] sm:$0xff]
    %v221 = vld [vmem:[#allocation4 + $0x70] sm:$0xff]
    %v222 = vld [vmem:[#allocation4 + $0x78] sm:$0xff]
    %v223 = vld [vmem:[#allocation4 + $0x80] sm:$0xff]
    %v224 = vld [vmem:[#allocation4 + $0x88] sm:$0xff]
    %v225 = vld [vmem:[#allocation4 + $0x90] sm:$0xff]
    %v226 = vld [vmem:[#allocation4 + $0x98] sm:$0xff]
    %v227 = vld [vmem:[#allocation4 + $0xa0] sm:$0xff]
    %v228 = vld [vmem:[#allocation4 + $0xa8] sm:$0xff]
    %v229 = vld [vmem:[#allocation4 + $0xb0] sm:$0xff]
    %v230 = vld [vmem:[#allocation4 + $0xb8] sm:$0xff]
    %v231 = vld [vmem:[#allocation4 + $0xc0] sm:$0xff]
    %v232 = vld [vmem:[#allocation4 + $0xc8] sm:$0xff]
    %v233 = vld [vmem:[#allocation4 + $0xd0] sm:$0xff]
    %v234 = vld [vmem:[#allocation4 + $0xd8] sm:$0xff]
    %v235 = vld [vmem:[#allocation4 + $0xe0] sm:$0xff]
    %v236 = vld [vmem:[#allocation4 + $0xe8] sm:$0xff]
    %v237 = vld [vmem:[#allocation4 + $0xf0] sm:$0xff]
    %v238 = vld [vmem:[#allocation4 + $0xf8] sm:$0xff]
    %v239 = vld [vmem:[%s4] sm:$0x1]
    %v241 = vlaneseq
    %v242 = vshrl.u32 %v241, 7
    %v243 = vsub.s32 0, %v242
    %v244 = vrot.slane %v239, %v243
    %246 = vmatprep.subr.mxu0 0.0
    %247 = vmatpush1.msra.mxu0 %v222
    %248 = vmatprep.subr.mxu0 0.0
    %249 = vmatpush1.msra.mxu0 %v221
    %250 = vmatprep.subr.mxu0 0.0
    %251 = vmatpush1.msra.mxu0 %v220
    %252 = vmatprep.subr.mxu0 0.0
    %253 = vmatpush1.msra.mxu0 %v219
    %254 = vmatprep.subr.mxu0 0.0
    %255 = vmatpush1.msra.mxu0 %v218
    %256 = vmatprep.subr.mxu0 0.0
    %257 = vmatpush1.msra.mxu0 %v217
    %258 = vmatprep.subr.mxu0 0.0
    %259 = vmatpush1.msra.mxu0 %v216
    %260 = vmatprep.subr.mxu0 0.0
    %261 = vmatpush1.msra.mxu0 %v215
    %262 = vmatprep.subr.mxu0 0.0
    %263 = vmatpush1.msra.mxu0 %v214
    %264 = vmatprep.subr.mxu0 0.0
    %265 = vmatpush1.msra.mxu0 %v213
    %266 = vmatprep.subr.mxu0 0.0
    %267 = vmatpush1.msra.mxu0 %v212
    %268 = vmatprep.subr.mxu0 0.0
    %269 = vmatpush1.msra.mxu0 %v211
    %270 = vmatprep.subr.mxu0 0.0
    %271 = vmatpush1.msra.mxu0 %v210
    %272 = vmatprep.subr.mxu0 0.0
    %273 = vmatpush1.msra.mxu0 %v209
    %274 = vmatprep.subr.mxu0 0.0
    %275 = vmatpush1.msra.mxu0 %v208
    %276 = vmatprep.subr.mxu0 0.0
    %277 = vmatpush1.msra.mxu0 %v207
    %278 = vmatprep.subr.mxu0 0.0
    %279 = vmatpush2.msra.mxu0 %v238
    %280 = vmatprep.subr.mxu0 0.0
    %281 = vmatpush2.msra.mxu0 %v237
    %282 = vmatprep.subr.mxu0 0.0
    %283 = vmatpush2.msra.mxu0 %v236
    %284 = vmatprep.subr.mxu0 0.0
    %285 = vmatpush2.msra.mxu0 %v235
    %286 = vmatprep.subr.mxu0 0.0
    %287 = vmatpush2.msra.mxu0 %v234
    %288 = vmatprep.subr.mxu0 0.0
    %289 = vmatpush2.msra.mxu0 %v233
    %290 = vmatprep.subr.mxu0 0.0
    %291 = vmatpush2.msra.mxu0 %v232
    %292 = vmatprep.subr.mxu0 0.0
    %293 = vmatpush2.msra.mxu0 %v231
    %294 = vmatprep.subr.mxu0 0.0
    %295 = vmatpush2.msra.mxu0 %v230
    %296 = vmatprep.subr.mxu0 0.0
    %297 = vmatpush2.msra.mxu0 %v229
    %298 = vmatprep.subr.mxu0 0.0
    %299 = vmatpush2.msra.mxu0 %v228
    %300 = vmatprep.subr.mxu0 0.0
    %301 = vmatpush2.msra.mxu0 %v227
    %302 = vmatprep.subr.mxu0 0.0
    %303 = vmatpush2.msra.mxu0 %v226
    %304 = vmatprep.subr.mxu0 0.0
    %305 = vmatpush2.msra.mxu0 %v225
    %306 = vmatprep.subr.mxu0 0.0
    %307 = vmatpush2.msra.mxu0 %v224
    %308 = vmatprep.subr.mxu0 0.0
    %309 = vmatpush2.msra.mxu0 %v223
    %310 = vmatprep.mubr.f32.mxu0 %v204
    %311 = vmatmul.mubr.f32.gmra.mxu0 %v203
    %v312 = vpop.f32.mrf.mxu0
    %v313 = vadd.f32 %v244, %v312
    %v314 = vpop.f32.mrf.mxu0
    %315 = vmatprep.mubr.f32.mxu0 %v206
    %316 = vmatmul.mubr.f32.gmra.mxu0 %v205
    %v317 = vpop.f32.mrf.mxu0
    %v318 = vadd.f32 %v244, %v317
    %v319 = vpop.f32.mrf.mxu0
    %320 = vdwg.mxu0
    %321 = vst [vmem:[%s5] sm:$0xff] %v313
    %322 = vst [vmem:[%s5 + $0x8] sm:$0xff] %v318
    // Predicated region
    $region30: #{positionwise_feed_forward.1} parent=1 // pred_check
      _
    $region31: #{positionwise_feed_forward.1} parent=1 // pred_check_branch
      %324 = sbr.rel (0) target = $region33
    $region32: #{positionwise_feed_forward.1} parent=1 // pred_region
      _
    $region33: #{positionwise_feed_forward.1} parent=1 // pred_fallthru
      _
    // Predicated region
    $region34: #{positionwise_feed_forward.1} parent=1 // pred_check
      _
    $region35: #{positionwise_feed_forward.1} parent=1 // pred_check_branch
      %326 = sbr.rel (0) target = $region37
    $region36: #{positionwise_feed_forward.1} parent=1 // pred_region
      _
    $region37: #{positionwise_feed_forward.1} parent=1 // pred_fallthru
      _
    %327 = vsyncpa [#allocation3], 1
    %328 = vsyncpa [#allocation5], 1

</llo_original>
